<compile_context>
chip_gen: v7x
topology: tpu7x:2x2x1
jax: 0.10.0
libtpu: 0.0.40
codegen_flags: <defaults>
</compile_context>

<pallas_src>
import numpy as np
import jax
import jax.numpy as jnp
from jax.experimental import pallas as pl
from jax.experimental.pallas import tpu as pltpu

EPS = 1e-12  # matches torch.nn.functional.normalize default eps


# ---------------------------------------------------------------------------
# Kernel
# ---------------------------------------------------------------------------
def gcn_kernel(x_ref, nb_ref, w1_ref, w2_ref, o_ref):
    # Inputs arrive as bf16 (halved HBM traffic); upcast to f32 so the VPU math
    # (l2norm / ReLU) is f32 -- required on v5e (no bf16 VPU) and keeps
    # torch.normalize parity.  VPU slot has huge slack, the cast is free.
    x = x_ref[...].astype(jnp.float32)        # [T, F]
    nb = nb_ref[...].astype(jnp.float32)      # [T, K, F]
    T, K, F = nb_ref.shape
    H1 = w1_ref.shape[1]

    def l2norm(v):
        ss = jnp.sum(v * v, axis=-1, keepdims=True)
        # rsqrt(max(ss, EPS^2)) == 1 / max(||v||, EPS): same clamp as torch but
        # on the EUP slot instead of sqrt + divide on the VPU.
        return v * jax.lax.rsqrt(jnp.maximum(ss, EPS * EPS))

    xn = l2norm(x)                            # [T, F]
    nbn = l2norm(nb)                          # [T, K, F]

    # Linearity #1: (xn + nbn_k) @ W1 == xn @ W1 + nbn_k @ W1  -> one MXU
    # matmul, broadcast-add done on the small F axis.  bf16 MXU operands,
    # f32 accumulation.
    pre = (xn[:, None, :] + nbn).astype(jnp.bfloat16).reshape(T * K, F)
    h1 = jnp.dot(pre, w1_ref[...], preferred_element_type=jnp.float32)   # [T*K, H1]
    nb_act = jnp.maximum(h1, 0.0).reshape(T, K, H1)   # ReLU (+ Dropout p=0 == identity)

    # Linearity #2: sum_k(relu(.) @ W2) == (sum_k relu(.)) @ W2 -> K x fewer
    # MXU flops and no [T,K,H2] intermediate.  (bf16 cast of the K-sum is fine
    # at small K; re-check tolerance if K grows to >=64.)
    agg1 = jnp.sum(nb_act, axis=1).astype(jnp.bfloat16)                  # [T, H1]
    agg2 = jnp.dot(agg1, w2_ref[...], preferred_element_type=jnp.float32)  # [T, H2]

    # acvt.  The H2 x C classifier is done in XLA on this narrow bf16 stream
    # (2*H2 bytes/row writeback instead of a 512 B/row padded f32 slab + a
    # second HBM slicing pass).
    o_ref[...] = jnp.maximum(agg2, 0.0).astype(o_ref.dtype)             # [T, H2] bf16
    # TODO(synk): nn.Dropout with p>0 would need pltpu.prng_seed/prng_random_bits.


# ---------------------------------------------------------------------------
# Tile / VMEM sizing helpers
# ---------------------------------------------------------------------------
def _ceil_to(v, m):
    return -(-v // m) * m


def _vmem_capacity_bytes():
    try:
        return pltpu.get_tpu_info().vmem_capacity_bytes
    except Exception:
        return 64 * 1024 * 1024   # conservative: v7x has 64 MiB per TensorCore


def _vmem_bytes_per_row(K, F, H1, H2, in_bytes=2, out_bytes=2):
    """Conservative per-batch-row VMEM footprint (lane pad to 128, K rides on
    sublanes of the (8,128) tile, double-buffered I/O blocks, f32 temps)."""
    lF, lH1, lH2 = _ceil_to(F, 128), _ceil_to(H1, 128), _ceil_to(H2, 128)
    Kp = max(K, 8)
    blocks = 2 * (Kp + 1) * lF * in_bytes + 2 * lH2 * out_bytes
    work = (2 * Kp * lF + 2 * lF + 2 * K * lH1 + lH1 + 2 * lH2) * 4
    return blocks + work


def _choose_tile_b(B, tile_b_req, per_row_bytes, fit_budget_bytes):
    """Largest batch tile that (a) fits the VMEM budget and (b) leaves >=2
    grid steps when possible so the 'parallel' B axis shards across v7x's two
    TensorCores (v5e/v6e single-TC: harmless)."""
    if B <= 16:                               # tiny batch: one full block
        return B
    fit = max(16, (fit_budget_bytes // max(per_row_bytes, 1)) // 16 * 16)
    tb = min(tile_b_req, fit)
    if tb >= B:                               # whole batch fits in one tile
        tb = -(-B // 2)                       # split in two for megacore
        tb = -(-tb // 16) * 16                # sublane / bf16-packing alignment
    return min(tb, B)


# ---------------------------------------------------------------------------
# Wrapper
# ---------------------------------------------------------------------------
def prepare_gcn_weights(w1, w2, wc):
    """One-time weight prep (bf16 casts), hoisted out of the per-call path."""
    return (w1.astype(jnp.bfloat16),
            w2.astype(jnp.bfloat16),
            wc.astype(jnp.bfloat16))


def gcn_forward(x, neighbor, w1b, w2b, wcb, *, tile_b=1024):
    B, F = x.shape
    _, K, _ = neighbor.shape
    H1, H2 = w1b.shape[1], w2b.shape[1]
    C = wcb.shape[1]

    # bf16 input streams (no-op casts if the caller already keeps activations
    # in bf16, which is the intended deployment).
    xb = x.astype(jnp.bfloat16)
    nbb = neighbor.astype(jnp.bfloat16)

    cap = _vmem_capacity_bytes()
    fit_budget = cap // 2                                   # sizing target
    vmem_limit = min((cap * 3) // 4, 100 * 1024 * 1024)     # raised scoped limit
    per_row = _vmem_bytes_per_row(K, F, H1, H2)
    tb = _choose_tile_b(B, tile_b, per_row, fit_budget)
    grid = (pl.cdiv(B, tb),)

    cost = pl.CostEstimate(
        flops=2 * B * K * F * H1 + 2 * B * H1 * H2,
        transcendentals=B * (K + 1),                        # one rsqrt per row
        bytes_accessed=(xb.size + nbb.size + B * H2) * 2    # bf16 activations
                       + (w1b.size + w2b.size) * 2,         # bf16 weights
    )

    h = pl.pallas_call(
        gcn_kernel,
        out_shape=jax.ShapeDtypeStruct((B, H2), jnp.bfloat16),
        grid_spec=pltpu.PrefetchScalarGridSpec(
            num_scalar_prefetch=0,
            grid=grid,
            in_specs=[
                pl.BlockSpec((tb, F), lambda i: (i, 0)),         # x tile (bf16)
                pl.BlockSpec((tb, K, F), lambda i: (i, 0, 0)),   # neighbor tile (bf16)
                pl.BlockSpec((F, H1), lambda i: (0, 0)),         # W1 (resident)
                pl.BlockSpec((H1, H2), lambda i: (0, 0)),        # W2 (resident)
            ],
            out_specs=pl.BlockSpec((tb, H2), lambda i: (i, 0)),  # relu(agg2) (bf16)
        ),
        compiler_params=pltpu.CompilerParams(
            # shard B across the 2 TCs on v7x; if profiling shows no sharding,
            # swap for pltpu.CORE_PARALLEL.
            dimension_semantics=("parallel",),
            vmem_limit_bytes=vmem_limit,
        ),
        cost_estimate=cost,
    )(xb, nbb, w1b, w2b)

    # Tiny classifier (H2 x C) on the narrow bf16 stream, then torch's
    # .squeeze(1) (only squeezes a size-1 dim).
    out = jnp.dot(h, wcb, preferred_element_type=jnp.float32)
    if C == 1:
        out = out[:, 0]
    return out


# ---------------------------------------------------------------------------
# Pure-JAX f32 reference mirroring the PyTorch forward
# ---------------------------------------------------------------------------
def gcn_reference(x, neighbor, w1, w2, wc):
    def l2norm(v):
        n = jnp.sqrt(jnp.sum(v * v, axis=-1, keepdims=True))
        return v / jnp.maximum(n, EPS)

    xn, nbn = l2norm(x), l2norm(neighbor)
    h1x = xn @ w1
    h1nb = jnp.einsum("bkf,fh->bkh", nbn, w1)
    nb_act = jax.nn.relu(h1x[:, None, :] + h1nb)
    agg2 = jnp.einsum("bkh,hg->bg", nb_act, w2)
    out = jax.nn.relu(agg2) @ wc
    if out.shape[1] == 1:
        out = out[:, 0]
    return out


def linear_weight(key, in_f, out_f):
    # Deterministic, PyTorch-Linear-like uniform bound; stored [in, out].
    bound = 1.0 / np.sqrt(in_f)
    return jax.random.uniform(key, (in_f, out_f), jnp.float32, -bound, bound)


if __name__ == "__main__":
    feat_len, num_class = 16, 3
    hidden = [64, 32]
    B, K = 2, 4  # 2 nodes, 4 neighbors each

    key = jax.random.PRNGKey(0)
    kx, knb, k1, k2, kc = jax.random.split(key, 5)

    x = jax.random.normal(kx, (B, feat_len), jnp.float32)
    neighbor = jax.random.normal(knb, (B, K, feat_len), jnp.float32)

    w1 = linear_weight(k1, feat_len, hidden[0])     # gcn1.linear (no bias)
    w2 = linear_weight(k2, hidden[0], hidden[1])    # gcn2.linear (no bias)
    wc = linear_weight(kc, hidden[1], num_class)    # classifier (no bias)

    # One-time weight prep, hoisted out of the per-call path.
    w1b, w2b, wcb = prepare_gcn_weights(w1, w2, wc)
    # In a deployed pipeline the activations would already live in bf16; cast
    # once here so the kernel's dominant input stream is half-width.
    xb = x.astype(jnp.bfloat16)
    nbb = neighbor.astype(jnp.bfloat16)

    out = gcn_forward(xb, nbb, w1b, w2b, wcb)
    out = jax.block_until_ready(out)

    ref = gcn_reference(x, neighbor, w1, w2, wc)
    assert out.shape == ref.shape
    # bf16 activations/weights (f32 accumulation) vs pure-f32 reference.
    assert np.allclose(np.asarray(out), np.asarray(ref), rtol=5e-2, atol=1e-2)

    print("KERNEL_OK")
</pallas_src>

<mosaic_0001>
module attributes {stable_mosaic.version = 11 : i64} {
  func.func @gcn_kernel(%arg0: i32, %arg1: memref<2x16xbf16, #tpu.memory_space<vmem>>, %arg2: memref<2x4x16xbf16, #tpu.memory_space<vmem>>, %arg3: memref<16x64xbf16, #tpu.memory_space<vmem>>, %arg4: memref<64x32xbf16, #tpu.memory_space<vmem>>, %arg5: memref<2x32xbf16, #tpu.memory_space<vmem>>) attributes {dimension_semantics = [#tpu.dimension_semantics<parallel>], iteration_bounds = array<i64: 1>, scalar_prefetch = 0 : i64, scratch_operands = 0 : i64, tpu.core_type = #tpu.core_type<tc>, window_params = [{transform_indices = @transform_0, window_bounds = array<i64: 2, 16>}, {transform_indices = @transform_1, window_bounds = array<i64: 2, 4, 16>}, {pipeline_mode = #tpu.pipeline_mode<synchronous>, transform_indices = @transform_2, window_bounds = array<i64: 16, 64>}, {pipeline_mode = #tpu.pipeline_mode<synchronous>, transform_indices = @transform_3, window_bounds = array<i64: 64, 32>}, {transform_indices = @transform_4, window_bounds = array<i64: 2, 32>}]} {
    %c0 = arith.constant 0 : index
    %c0_0 = arith.constant 0 : index
    %0 = vector.load %arg1[%c0, %c0_0] : memref<2x16xbf16, #tpu.memory_space<vmem>>, vector<2x16xbf16>
    %1 = arith.extf %0 : vector<2x16xbf16> to vector<2x16xf32>
    %c0_1 = arith.constant 0 : index
    %c0_2 = arith.constant 0 : index
    %c0_3 = arith.constant 0 : index
    %2 = vector.load %arg2[%c0_1, %c0_2, %c0_3] : memref<2x4x16xbf16, #tpu.memory_space<vmem>>, vector<2x4x16xbf16>
    %3 = arith.extf %2 : vector<2x4x16xbf16> to vector<2x4x16xf32>
    %4 = arith.mulf %1, %1 : vector<2x16xf32>
    %cst = arith.constant dense<0.000000e+00> : vector<2xf32>
    %5 = vector.multi_reduction <add>, %4, %cst [1] : vector<2x16xf32> to vector<2xf32>
    %6 = vector.shape_cast %5 : vector<2xf32> to vector<2x1xf32>
    %cst_4 = arith.constant 1.000000e-24 : f32
    %7 = vector.broadcast %cst_4 : f32 to vector<2x1xf32>
    %8 = arith.maximumf %6, %7 : vector<2x1xf32>
    %9 = math.rsqrt %8 : vector<2x1xf32>
    %10 = vector.broadcast %9 : vector<2x1xf32> to vector<2x16xf32>
    %11 = arith.mulf %1, %10 : vector<2x16xf32>
    %12 = arith.mulf %3, %3 : vector<2x4x16xf32>
    %cst_5 = arith.constant dense<0.000000e+00> : vector<2x4xf32>
    %13 = vector.multi_reduction <add>, %12, %cst_5 [2] : vector<2x4x16xf32> to vector<2x4xf32>
    %14 = vector.shape_cast %13 : vector<2x4xf32> to vector<2x4x1xf32>
    %cst_6 = arith.constant 1.000000e-24 : f32
    %15 = vector.broadcast %cst_6 : f32 to vector<2x4x1xf32>
    %16 = arith.maximumf %14, %15 : vector<2x4x1xf32>
    %17 = math.rsqrt %16 : vector<2x4x1xf32>
    %18 = vector.broadcast %17 : vector<2x4x1xf32> to vector<2x4x16xf32>
    %19 = arith.mulf %3, %18 : vector<2x4x16xf32>
    %20 = vector.shape_cast %11 : vector<2x16xf32> to vector<2x1x16xf32>
    %21 = vector.broadcast %20 : vector<2x1x16xf32> to vector<2x4x16xf32>
    %22 = arith.addf %21, %19 : vector<2x4x16xf32>
    %23 = arith.truncf %22 : vector<2x4x16xf32> to vector<2x4x16xbf16>
    %24 = vector.shape_cast %23 : vector<2x4x16xbf16> to vector<8x16xbf16>
    %c0_7 = arith.constant 0 : index
    %c0_8 = arith.constant 0 : index
    %25 = vector.load %arg3[%c0_7, %c0_8] : memref<16x64xbf16, #tpu.memory_space<vmem>>, vector<16x64xbf16>
    %cst_9 = arith.constant dense<0.000000e+00> : vector<8x64xf32>
    %26 = tpu.matmul %24, %25, %cst_9 {dimension_numbers = #tpu.dot_dimension_numbers<[1], [0], [0], [1], [0, 0, 1, 1], [], []>} : vector<8x16xbf16>, vector<16x64xbf16>, vector<8x64xf32> -> vector<8x64xf32>
    %cst_10 = arith.constant 0.000000e+00 : f32
    %27 = vector.broadcast %cst_10 : f32 to vector<8x64xf32>
    %28 = arith.maximumf %26, %27 : vector<8x64xf32>
    %29 = vector.shape_cast %28 : vector<8x64xf32> to vector<2x4x64xf32>
    %cst_11 = arith.constant dense<0.000000e+00> : vector<2x64xf32>
    %30 = vector.multi_reduction <add>, %29, %cst_11 [1] : vector<2x4x64xf32> to vector<2x64xf32>
    %31 = arith.truncf %30 : vector<2x64xf32> to vector<2x64xbf16>
    %c0_12 = arith.constant 0 : index
    %c0_13 = arith.constant 0 : index
    %32 = vector.load %arg4[%c0_12, %c0_13] : memref<64x32xbf16, #tpu.memory_space<vmem>>, vector<64x32xbf16>
    %cst_14 = arith.constant dense<0.000000e+00> : vector<2x32xf32>
    %33 = tpu.matmul %31, %32, %cst_14 {dimension_numbers = #tpu.dot_dimension_numbers<[1], [0], [0], [1], [0, 0, 1, 1], [], []>} : vector<2x64xbf16>, vector<64x32xbf16>, vector<2x32xf32> -> vector<2x32xf32>
    %cst_15 = arith.constant 0.000000e+00 : f32
    %34 = vector.broadcast %cst_15 : f32 to vector<2x32xf32>
    %35 = arith.maximumf %33, %34 : vector<2x32xf32>
    %36 = arith.truncf %35 : vector<2x32xf32> to vector<2x32xbf16>
    %c0_16 = arith.constant 0 : index
    %c0_17 = arith.constant 0 : index
    %37 = vector.load %arg5[%c0_16, %c0_17] : memref<2x32xbf16, #tpu.memory_space<vmem>>, vector<2x32xbf16>
    tpu.vector_store %arg5[%c0_16, %c0_17], %36 {strides = array<i32>} : memref<2x32xbf16, #tpu.memory_space<vmem>>, vector<2x32xbf16>,
    return
  }
  func.func @transform_0(%arg0: i32) -> (i32, i32) {
    %c0_i32 = arith.constant 0 : i32
    %c0_i32_0 = arith.constant 0 : i32
    return %arg0, %c0_i32 : i32, i32
  }
  func.func @transform_1(%arg0: i32) -> (i32, i32, i32) {
    %c0_i32 = arith.constant 0 : i32
    %c0_i32_0 = arith.constant 0 : i32
    %c0_i32_1 = arith.constant 0 : i32
    return %arg0, %c0_i32, %c0_i32_0 : i32, i32, i32
  }
  func.func @transform_2(%arg0: i32) -> (i32, i32) {
    %c0_i32 = arith.constant 0 : i32
    %c0_i32_0 = arith.constant 0 : i32
    %c0_i32_1 = arith.constant 0 : i32
    return %c0_i32, %c0_i32_0 : i32, i32
  }
  func.func @transform_3(%arg0: i32) -> (i32, i32) {
    %c0_i32 = arith.constant 0 : i32
    %c0_i32_0 = arith.constant 0 : i32
    %c0_i32_1 = arith.constant 0 : i32
    return %c0_i32, %c0_i32_0 : i32, i32
  }
  func.func @transform_4(%arg0: i32) -> (i32, i32) {
    %c0_i32 = arith.constant 0 : i32
    %c0_i32_0 = arith.constant 0 : i32
    return %arg0, %c0_i32 : i32, i32
  }
}

</mosaic_0001>

<llo_original>
// kernel: tpu_custom_call.1
$region0: #{tpu_custom_call.1}
  #allocation0 [shape = 'u32[]', space=smem, size = 0x4, offset = 0x4, fixed_abs, tag = 'smem constant byte address 0x4 - core index']
  #allocation1 [shape = 'u32[144,128]{1,0:T(1,128)}', space=vmem, size = 0x12000, scoped, tag = 'internal scratch']
  %s0 = inlined_call_operand.vmem [shape: bf16[2,16], index: 0, kind: input, shape index: {}]
  %s1 = inlined_call_operand.vmem [shape: bf16[2,4,16], index: 1, kind: input, shape index: {}]
  %s2 = inlined_call_operand.vmem [shape: bf16[16,64], index: 2, kind: input, shape index: {}]
  %s3 = inlined_call_operand.vmem [shape: bf16[64,32], index: 3, kind: input, shape index: {}]
  %s4 = inlined_call_operand.hbm [shape: bf16[2,32], index: 4, kind: output, shape index: {}]
  %s5 = sld [smem:[#allocation0]]
  $region26: #{tpu_custom_call.1} parent=0
    _
  %s7 = ssub.s32 1, %s5
  %s8 = scalar_select 0, %s7, %s5
  $region1: #{tpu_custom_call.1} parent=0
    #allocation2 [shape = 'u8[512]{0}', space=vmem, size = 0x400, scoped, tag = 'output window, operand 0, single buffered']
    #allocation3 [shape = 's32[1]{0}', space=sflag, size = 0x4, scoped, tag = 'scoped memory for tpu_custom_call.1']
    %9 = vsyncpa [#allocation3], 0
    // Predicated region
    $region2: #{tpu_custom_call.1} parent=1 // pred_check
      _
    $region3: #{tpu_custom_call.1} parent=1 // pred_check_branch
      %11 = sbr.rel (0) target = $region5
    $region4: #{tpu_custom_call.1} parent=1 // pred_region
      _
    $region5: #{tpu_custom_call.1} parent=1 // pred_fallthru
      _
    // Predicated region
    $region6: #{tpu_custom_call.1} parent=1 // pred_check
      _
    $region7: #{tpu_custom_call.1} parent=1 // pred_check_branch
      %13 = sbr.rel (0) target = $region9
    $region8: #{tpu_custom_call.1} parent=1 // pred_region
      _
    $region9: #{tpu_custom_call.1} parent=1 // pred_fallthru
      _
    // Predicated region
    $region10: #{tpu_custom_call.1} parent=1 // pred_check
      _
    $region11: #{tpu_custom_call.1} parent=1 // pred_check_branch
      %15 = sbr.rel (0) target = $region13
    $region12: #{tpu_custom_call.1} parent=1 // pred_region
      _
    $region13: #{tpu_custom_call.1} parent=1 // pred_fallthru
      _
    // Predicated region
    $region14: #{tpu_custom_call.1} parent=1 // pred_check
      _
    $region15: #{tpu_custom_call.1} parent=1 // pred_check_branch
      %17 = sbr.rel (0) target = $region17
    $region16: #{tpu_custom_call.1} parent=1 // pred_region
      _
    $region17: #{tpu_custom_call.1} parent=1 // pred_fallthru
      _
    %v19 = vld [vmem:[%s0] sm:$0x1]
    %v20 = vunpack.c.l.bf16 %v19
    %v21 = vld [vmem:[%s1] sm:$0x3]
    %v22 = vld [vmem:[%s1 + $0x2] sm:$0x3]
    %v23 = vunpack.c.l.bf16 %v21
    %v24 = vunpack.c.l.bf16 %v22
    %v25 = vmul.f32 %v20, %v20
    %vm26 = vcmask 123904
    %v27 = vsel %vm26, %v25, 0.0
    %28 = vadd.xlane.f32.xlu0 %v27
    %v29 = vpop.xlane.xlu0 %28
    %v30 = vmax.f32 %v29, 1e-24
    %v31 = vrsqrt.pop %v30
    %v32 = vmul.f32 %v20, %v31
    %v33 = vmul.f32 %v23, %v23
    %v34 = vmul.f32 %v24, %v24
    %vm35 = vcmask 125952
    %v36 = vsel %vm35, %v33, 0.0
    %37 = vadd.xlane.f32.xlu0 %v36
    %v38 = vpop.xlane.xlu0 %37
    %v39 = vsel %vm35, %v34, 0.0
    %40 = vadd.xlane.f32.xlu0 %v39
    %v41 = vpop.xlane.xlu0 %40
    %v42 = vmax.f32 %v38, 1e-24
    %v43 = vmax.f32 %v41, 1e-24
    %v44 = vrsqrt.pop %v42
    %v45 = vrsqrt.pop %v43
    %v46 = vmul.f32 %v23, %v44
    %v47 = vmul.f32 %v24, %v45
    %v50 = vunpack.c.l.s4 1966171168
    %v51 = vunpack.c.0.s8 %v50
    %v52 = vlaneseq
    %v53 = vshrl.u32 %v52, 7
    %v54 = vsub.s32 %v51, %v53
    %v55 = vrot.slane %v32, %v54
    %v56 = vcombine.high %v55, %v55
    %v57 = vlaneseq
    %v58 = vshrl.u32 %v57, 7
    %v59 = vsub.s32 0, %v58
    %v60 = vrot.slane %v55, %v59
    %v61 = vlaneseq
    %v62 = vshrl.u32 %v61, 7
    %v63 = vsub.s32 0, %v62
    %v64 = vrot.slane %v56, %v63
    %v67 = vadd.f32 %v60, %v46
    %v68 = vadd.f32 %v64, %v47
    %v69 = vpack.c.bf16 %v67, %v67
    %v70 = vpack.c.bf16 %v68, %v68
    %v71 = vld [vmem:[%s2] sm:$0xf]
    %v72 = vld [vmem:[%s2 + $0x4] sm:$0xf]
    %v75 = vcombine.low %v69, %v70
    %v77 = vunpack.c.l.s4 1983009808
    %v78 = vunpack.c.0.s8 %v77
    %v79 = vlaneseq
    %v80 = vshrl.u32 %v79, 7
    %v81 = vsub.s32 %v78, %v80
    %v82 = vrot.slane %v75, %v81
    %v85 = vunpack.c.l.b16 %v71
    %v86 = vunpack.c.l.b16 %v72
    %v87 = vpack.c.b16 %v86, %v85
    %vm89 = vcmask 130048
    %v91 = vsel %vm89, %v82, 0
    %93 = vmatprep.subr.bf16.mxu0 0
    %94 = vmatpush1.bf16.msra.mxu0 %v87
    %95 = vmatprep.subr.bf16.mxu0 0
    %96 = vmatpush1.bf16.msra.mxu0 0
    %97 = vmatprep.subr.bf16.mxu0 0
    %98 = vmatpush1.bf16.msra.mxu0 0
    %99 = vmatprep.subr.bf16.mxu0 0
    %100 = vmatpush1.bf16.msra.mxu0 0
    %101 = vmatprep.subr.bf16.mxu0 0
    %102 = vmatpush1.bf16.msra.mxu0 0
    %103 = vmatprep.subr.bf16.mxu0 0
    %104 = vmatpush1.bf16.msra.mxu0 0
    %105 = vmatprep.subr.bf16.mxu0 0
    %106 = vmatpush1.bf16.msra.mxu0 0
    %107 = vmatprep.subr.bf16.mxu0 0
    %108 = vmatpush1.bf16.msra.mxu0 0
    %109 = vmatprep.subr.bf16.mxu0 0
    %110 = vmatpush1.bf16.msra.mxu0 0
    %111 = vmatprep.subr.bf16.mxu0 0
    %112 = vmatpush1.bf16.msra.mxu0 0
    %113 = vmatprep.subr.bf16.mxu0 0
    %114 = vmatpush1.bf16.msra.mxu0 0
    %115 = vmatprep.subr.bf16.mxu0 0
    %116 = vmatpush1.bf16.msra.mxu0 0
    %117 = vmatprep.subr.bf16.mxu0 0
    %118 = vmatpush1.bf16.msra.mxu0 0
    %119 = vmatprep.subr.bf16.mxu0 0
    %120 = vmatpush1.bf16.msra.mxu0 0
    %121 = vmatprep.subr.bf16.mxu0 0
    %122 = vmatpush1.bf16.msra.mxu0 0
    %123 = vmatprep.subr.bf16.mxu0 0
    %124 = vmatpush1.bf16.msra.mxu0 0
    %125 = vmatprep.mubr.bf16.mxu0 0
    %126 = vmatmul.mubr.bf16.gmra.mrb[0].mxu0 %v91
    %v127 = vpop.f32.mrb[0].mxu0
    %v128 = vadd.f32 0.0, %v127
    %v129 = vpop.f32.mrb[0].mxu0
    %v130 = vpop.f32.mrb[0].mxu0
    %v131 = vpop.f32.mrb[0].mxu0
    %132 = vdwg.mxu0
    %v133 = vmax.f32 %v128, 0.0
    %v135 = vcombine.high %v133, %v133
    %vm137 = vcmask 519168
    %v138 = vsel %vm137, %v133, 0.0
    %v139 = vrot.slane %v138, 4
    %v140 = vadd.f32 %v138, %v139
    %v141 = vrot.slane %v140, 2
    %v142 = vadd.f32 %v140, %v141
    %v143 = vrot.slane %v142, 1
    %v144 = vadd.f32 %v142, %v143
    %v145 = vsel %vm137, %v135, 0.0
    %v146 = vrot.slane %v145, 4
    %v147 = vadd.f32 %v145, %v146
    %v148 = vrot.slane %v147, 2
    %v149 = vadd.f32 %v147, %v148
    %v150 = vrot.slane %v149, 1
    %v151 = vadd.f32 %v149, %v150
    %v152 = vpack.c.bf16 %v144, %v144
    %v153 = vpack.c.bf16 %v151, %v151
    %v154 = vld [vmem:[%s3] sm:$0xf]
    %v155 = vld [vmem:[%s3 + $0x4] sm:$0xf]
    %v156 = vld [vmem:[%s3 + $0x8] sm:$0xf]
    %v157 = vld [vmem:[%s3 + $0xc] sm:$0xf]
    %v158 = vld [vmem:[%s3 + $0x10] sm:$0xf]
    %v159 = vld [vmem:[%s3 + $0x14] sm:$0xf]
    %v160 = vld [vmem:[%s3 + $0x18] sm:$0xf]
    %v161 = vld [vmem:[%s3 + $0x1c] sm:$0xf]
    %v164 = vunpack.c.l.b16 %v152
    %v165 = vunpack.c.l.b16 %v153
    %vm166 = vcmask 1041409
    %v167 = vsel %vm166, %v165, %v164
    %v168 = vpack.c.b16 %v167, %v167
    %v177 = vunpack.c.l.b16 %v154
    %v178 = vunpack.c.l.b16 %v155
    %v179 = vunpack.c.l.b16 %v156
    %v180 = vunpack.c.l.b16 %v157
    %v181 = vunpack.c.l.b16 %v158
    %v182 = vunpack.c.l.b16 %v159
    %v183 = vunpack.c.l.b16 %v160
    %v184 = vunpack.c.l.b16 %v161
    %v185 = vpack.c.b16 %v178, %v177
    %v186 = vpack.c.b16 %v180, %v179
    %v187 = vpack.c.b16 %v182, %v181
    %v188 = vpack.c.b16 %v184, %v183
    %vm193 = vcmask 523264
    %v195 = vsel %vm193, %v168, 0
    %197 = vmatprep.subr.bf16.mxu0 0
    %198 = vmatpush1.bf16.msra.mxu0 %v185
    %199 = vmatprep.subr.bf16.mxu0 0
    %200 = vmatpush1.bf16.msra.mxu0 %v186
    %201 = vmatprep.subr.bf16.mxu0 0
    %202 = vmatpush1.bf16.msra.mxu0 %v187
    %203 = vmatprep.subr.bf16.mxu0 0
    %204 = vmatpush1.bf16.msra.mxu0 %v188
    %205 = vmatprep.subr.bf16.mxu0 0
    %206 = vmatpush1.bf16.msra.mxu0 0
    %207 = vmatprep.subr.bf16.mxu0 0
    %208 = vmatpush1.bf16.msra.mxu0 0
    %209 = vmatprep.subr.bf16.mxu0 0
    %210 = vmatpush1.bf16.msra.mxu0 0
    %211 = vmatprep.subr.bf16.mxu0 0
    %212 = vmatpush1.bf16.msra.mxu0 0
    %213 = vmatprep.subr.bf16.mxu0 0
    %214 = vmatpush1.bf16.msra.mxu0 0
    %215 = vmatprep.subr.bf16.mxu0 0
    %216 = vmatpush1.bf16.msra.mxu0 0
    %217 = vmatprep.subr.bf16.mxu0 0
    %218 = vmatpush1.bf16.msra.mxu0 0
    %219 = vmatprep.subr.bf16.mxu0 0
    %220 = vmatpush1.bf16.msra.mxu0 0
    %221 = vmatprep.subr.bf16.mxu0 0
    %222 = vmatpush1.bf16.msra.mxu0 0
    %223 = vmatprep.subr.bf16.mxu0 0
    %224 = vmatpush1.bf16.msra.mxu0 0
    %225 = vmatprep.subr.bf16.mxu0 0
    %226 = vmatpush1.bf16.msra.mxu0 0
    %227 = vmatprep.subr.bf16.mxu0 0
    %228 = vmatpush1.bf16.msra.mxu0 0
    %229 = vmatprep.mubr.bf16.mxu0 0
    %230 = vmatmul.mubr.bf16.gmra.mrb[0].mxu0 %v195
    %v231 = vpop.f32.mrb[0].mxu0
    %v232 = vadd.f32 0.0, %v231
    %v233 = vpop.f32.mrb[0].mxu0
    %v234 = vpop.f32.mrb[0].mxu0
    %v235 = vpop.f32.mrb[0].mxu0
    %236 = vdwg.mxu0
    %v237 = vmax.f32 %v232, 0.0
    %v238 = vpack.c.bf16 %v237, %v237
    %vm239 = vcmask 253952
    %240 = vst.msk [vmem:[#allocation2] sm:$0x1] %vm239, %v238
    // Predicated region
    $region18: #{tpu_custom_call.1} parent=1 // pred_check
      _
    $region19: #{tpu_custom_call.1} parent=1 // pred_check_branch
      %242 = sbr.rel (0) target = $region21
    $region20: #{tpu_custom_call.1} parent=1 // pred_region
      %s244 = ssub.s32 16, 16
      %245 = vsyncadd [#allocation3], %s244
      %s247 = sshll.u32 [#allocation2], 4
      %s248 = int_to_ptr.vmem [resolvable:$true] %s247
      %250 = dma.vmem_to_hbm [thread:$0]  %s248, 16, %s4, [#allocation3]
    $region21: #{tpu_custom_call.1} parent=1 // pred_fallthru
      _
    // Predicated region
    $region22: #{tpu_custom_call.1} parent=1 // pred_check
      _
    $region23: #{tpu_custom_call.1} parent=1 // pred_check_branch
      %252 = sbr.rel (0) target = $region25
    $region24: #{tpu_custom_call.1} parent=1 // pred_region
      %253 = dma.done [#allocation3], 16
    $region25: #{tpu_custom_call.1} parent=1 // pred_fallthru
      _
    %254 = vsyncpa [#allocation3], 1

</llo_original>
